<compile_context>
chip_gen: v7x
topology: tpu7x:2x2x1
jax: 0.10.0
libtpu: 0.0.40
codegen_flags: <defaults>
</compile_context>

<pallas_src>
import functools

import jax
import jax.numpy as jnp
from jax import lax
from jax.experimental import pallas as pl
from jax.experimental.pallas import tpu as pltpu


def _round_up(x, m):
    return ((x + m - 1) // m) * m


def _grand_kernel(x_ref, adj_ref, w1_ref, b1_ref, w2_ref, b2_ref, out_ref,
                  u0_ref, u1_ref, v_ref, dinv_ref,
                  *, order, drop_rate, tr, preproject, state_dtype):
    k = pl.program_id(0)                      # hop index: 0 = init, 1..K = hops
    r = pl.program_id(1)                      # node row block
    row0 = pl.multiple_of(r * tr, tr)
    rows = pl.ds(row0, tr)

    @pl.when(k == 0)
    def _init():
        # Degrees from a single lane-direction reduce (graph assumed symmetric).
        # f32 accumulation; runs once per row block, so the widen is cheap.
        deg = jnp.maximum(
            jnp.sum(adj_ref[...], axis=1, keepdims=True, dtype=jnp.float32), 1.0)
        dinv_ref[rows, :] = 1.0 / deg
        x0 = x_ref[...].astype(jnp.float32)                            # (tr, in_dim)
        if preproject:        # A^i(x W1) == (A^i x) W1: propagate the narrow width
            x0 = jnp.dot(x0, w1_ref[...], preferred_element_type=jnp.float32)
        u0 = x0 * lax.rsqrt(deg)   # u_0 = D^{-1/2} x ; (1-p)/(K+1) folded at the end
        u0_ref[rows, :] = u0.astype(state_dtype)
        v_ref[rows, :] = u0

    def _hop(src_ref, dst_ref):
        # u_{t+1}[rows] = D^{-1}[rows] * (A[rows, :] @ u_t);  v[rows] += u_{t+1}[rows]
        # adj and u keep their (possibly bf16) dtype; the MXU accumulates in f32.
        au = jnp.dot(adj_ref[...], src_ref[...],
                     preferred_element_type=jnp.float32)               # (tr, F) f32
        u_new = au * dinv_ref[rows, :]
        dst_ref[rows, :] = u_new.astype(state_dtype)
        v_ref[rows, :] = v_ref[rows, :] + u_new

    odd = (k % 2) == 1

    @pl.when((k > 0) & odd)
    def _():
        _hop(u0_ref, u1_ref)

    @pl.when((k > 0) & jnp.logical_not(odd))
    def _():
        _hop(u1_ref, u0_ref)

    @pl.when(k == order)
    def _finalize():
        c = (1.0 - drop_rate) / (order + 1.0)
        sqrt_deg = lax.rsqrt(dinv_ref[rows, :])       # sqrt(deg) == rsqrt(1/deg)
        y = v_ref[rows, :] * (sqrt_deg * c)                            # (tr, F)
        if preproject:
            h = jnp.maximum(y + b1_ref[...], 0.0)
        else:
            h = jnp.maximum(
                jnp.dot(y, w1_ref[...], preferred_element_type=jnp.float32)
                + b1_ref[...], 0.0)
        logits = (jnp.dot(h, w2_ref[...], preferred_element_type=jnp.float32)
                  + b2_ref[...])
        m = jnp.max(logits, axis=-1, keepdims=True)
        lse = m + jnp.log(jnp.sum(jnp.exp(logits - m), axis=-1, keepdims=True))
        out_ref[...] = (logits - lse).astype(out_ref.dtype)


def _vmem_capacity_bytes():
    """Per-core VMEM capacity; conservative (v7x-sized) fallback if unknown."""
    try:
        info = pltpu.get_tpu_info()
        for name in ("vmem_capacity_bytes", "vmem_bytes", "vmem_size_bytes"):
            v = getattr(info, name, None)
            if v:
                return int(v)
    except Exception:
        pass
    return 64 << 20


def _estimate_vmem_bytes(*, n, tr, in_dim, feat_width, hid, n_cls_pad,
                         adj_itemsize, feats_itemsize, state_itemsize):
    """Lane/sublane-padded VMEM footprint estimate for a given row block."""
    f32 = 4
    n_sub = _round_up(n, 8)
    tr_sub = _round_up(tr, 8)
    n_lane = _round_up(n, 128)
    f_pad = _round_up(feat_width, 128)
    in_pad = _round_up(in_dim, 128)
    hid_pad = _round_up(hid, 128)
    # Persistent scratch (lives across the whole grid).
    scratch = (2 * n_sub * f_pad * state_itemsize          # u ping/pong
               + n_sub * f_pad * f32                       # v = sum_t u_t (f32)
               + n_sub * 128 * f32)                        # 1/deg (lane padded)
    # Streamed blocks (Pallas double-buffers each).
    blocks = 2 * (tr_sub * n_lane * adj_itemsize           # adj row block
                  + tr_sub * in_pad * feats_itemsize       # feats row block
                  + tr_sub * n_cls_pad * f32)              # output row block
    # Resident weights (still counted with 2 buffers to stay conservative).
    weights = 2 * f32 * (_round_up(in_dim, 8) * hid_pad + 8 * hid_pad
                         + _round_up(hid, 8) * n_cls_pad + 8 * n_cls_pad)
    # In-kernel temporaries (hop product, finalize activations/logits,
    # one-time f32 widen of the adj block for the degree reduce).
    temps = (3 * tr_sub * f_pad * f32
             + 2 * tr_sub * n_cls_pad * f32
             + tr_sub * hid_pad * f32
             + tr_sub * n_lane * f32)
    return scratch + blocks + weights + temps


def _pick_row_block(n, budget, est):
    """Prefer a fully-resident adjacency (one HBM pass for all K hops); else the
    largest streamed row block whose footprint fits the VMEM budget."""
    if est(n) <= budget:
        return n
    for tr in (1024, 512, 256, 128):
        if tr < n and n % tr == 0 and est(tr) <= budget:
            return tr
    for tr in (128, 256, 512, 1024):
        if tr < n and n % tr == 0:
            return tr       # nothing fits the budget: smallest valid streamed block
    return n


def grand_forward(feats, adj, w1, b1, w2, b2, *, K=8, node_dropout=0.5):
    """GRAND inference forward as a single tiled Pallas kernel call."""
    n, in_dim = feats.shape
    hid = w1.shape[1]
    n_class = w2.shape[1]
    n_cls_pad = max(128, _round_up(n_class, 128))

    # Propagation dtype: keep the native-MXU bf16 path when adj is narrow,
    # otherwise full f32.  adj always matches the propagated-state dtype so the
    # hop matmul never materializes a per-step cast temp in VMEM.
    if adj.dtype == jnp.bfloat16:
        state_dtype = jnp.bfloat16
    elif adj.dtype == jnp.float32:
        state_dtype = jnp.float32
    else:
        # TODO(synk): feed int8 0/1 adjacency straight to the MXU (v6e) to halve
        # streamed adj traffic; for now cast to bf16 (0/1 entries are exact).
        state_dtype = jnp.bfloat16
        adj = adj.astype(jnp.bfloat16)

    # Lane-dense classifier: pad classes to >=128 lanes (sliced off below).
    # Padded logits get a -1e30 bias so they vanish from the log-softmax.
    w2p = jnp.pad(w2.astype(jnp.float32), ((0, 0), (0, n_cls_pad - n_class)))
    b2p = jnp.pad(b2.astype(jnp.float32), ((0, 0), (0, n_cls_pad - n_class)),
                  constant_values=-1e30)
    w1 = w1.astype(jnp.float32)
    b1 = b1.astype(jnp.float32)

    # Pre-project with W1 only if it reduces the number of 128-lane groups that
    # the hop matmul and the u/v scratch have to carry.
    preproject = _round_up(in_dim, 128) > _round_up(hid, 128)
    feat_width = hid if preproject else in_dim

    cap = _vmem_capacity_bytes()
    budget = int(cap * 0.75)       # ~48 MiB on v7x (64 MiB VMEM), ~96 MiB on v5e/v6e
    est = functools.partial(
        _estimate_vmem_bytes, n=n, in_dim=in_dim, feat_width=feat_width, hid=hid,
        n_cls_pad=n_cls_pad, adj_itemsize=adj.dtype.itemsize,
        feats_itemsize=feats.dtype.itemsize,
        state_itemsize=jnp.dtype(state_dtype).itemsize)
    tr = _pick_row_block(n, budget, lambda t: est(tr=t))
    n_row_blocks = n // tr
    grid = (K + 1, n_row_blocks)
    last_blk = n_row_blocks - 1

    vmem_limit = max(est(tr=tr) + (8 << 20), 32 << 20)
    vmem_limit = min(vmem_limit, int(cap * 0.78))

    kernel = functools.partial(
        _grand_kernel, order=K, drop_rate=node_dropout, tr=tr,
        preproject=preproject, state_dtype=state_dtype)

    # HBM traffic: adj is DMA'd once when resident (n_row_blocks == 1), else it
    # is re-streamed every hop; feats is read once per row block; each output
    # tile is written once (k-aware index maps below).
    adj_passes = 1 if n_row_blocks == 1 else (K + 1)
    f32 = 4
    cost = pl.CostEstimate(
        flops=2 * K * n * n * feat_width
              + 2 * n * in_dim * hid + 2 * n * hid * n_cls_pad,
        transcendentals=n * (n_cls_pad + 4),
        bytes_accessed=adj_passes * n * n * adj.dtype.itemsize
                       + n * in_dim * feats.dtype.itemsize
                       + n * n_cls_pad * f32
                       + f32 * (in_dim * hid + hid + hid * n_cls_pad + n_cls_pad),
    )

    out_padded = pl.pallas_call(
        kernel,
        out_shape=jax.ShapeDtypeStruct((n, n_cls_pad), jnp.float32),
        grid=grid,
        in_specs=[
            # feats: only consumed at k == 0; park the index afterwards so each
            # row block is DMA'd exactly once instead of (K+1) times.
            pl.BlockSpec((tr, in_dim),
                         lambda k, r: (jnp.where(k == 0, r, last_blk), 0)),
            # adjacency row block: resident (single DMA) when n_row_blocks == 1.
            pl.BlockSpec((tr, n), lambda k, r: (r, 0)),
            pl.BlockSpec((in_dim, hid), lambda k, r: (0, 0)),      # W1 (resident)
            pl.BlockSpec((1, hid), lambda k, r: (0, 0)),           # b1
            pl.BlockSpec((hid, n_cls_pad), lambda k, r: (0, 0)),   # W2 (padded)
            pl.BlockSpec((1, n_cls_pad), lambda k, r: (0, 0)),     # b2 (padded)
        ],
        # Output only materializes at the final hop; keep its block index
        # k-invariant before that so every row tile is written back to HBM once.
        out_specs=pl.BlockSpec((tr, n_cls_pad),
                               lambda k, r: (jnp.where(k == K, r, 0), 0)),
        scratch_shapes=[
            pltpu.VMEM((n, feat_width), state_dtype),   # u (ping)
            pltpu.VMEM((n, feat_width), state_dtype),   # u (pong)
            pltpu.VMEM((n, feat_width), jnp.float32),   # v = sum_t u_t (f32 accum)
            pltpu.VMEM((n, 1), jnp.float32),            # 1 / deg
        ],
        compiler_params=pltpu.CompilerParams(
            # Every row block of a hop reads the full previous-hop state from the
            # shared scratch, so both axes stay sequential on one core.
            # TODO(synk): on v7x, split feat_width across the two TensorCores
            # (column slices of u propagate independently) via core_map +
            # VMEM_SHARED with one cross-core add of the partial logits at finalize.
            dimension_semantics=("arbitrary", "arbitrary"),
            vmem_limit_bytes=vmem_limit,
        ),
        cost_estimate=cost,
    )(feats, adj, w1, b1, w2p, b2p)

    return out_padded[:, :n_class]


def _reference(feats, adj, w1, b1, w2, b2, *, K, node_dropout):
    """Pure-JAX reference mirroring the PyTorch forward (training=False)."""
    x = feats * (1.0 - node_dropout)
    deg = jnp.maximum(adj.sum(axis=0), 1.0)            # in-degrees (symmetric graph)
    norm = deg ** -0.5
    ahat = norm[:, None] * adj * norm[None, :]
    y = x
    cur = x
    for _ in range(K):
        cur = ahat @ cur
        y = y + cur
    y = y / (K + 1)
    h = jnp.maximum(y @ w1 + b1, 0.0)
    logits = h @ w2 + b2
    return jax.nn.log_softmax(logits, axis=-1)


def _make_inputs(key, n, in_dim, hid, n_class):
    k_adj, k_x, k_w1, k_b1, k_w2, k_b2 = jax.random.split(key, 6)
    rnd = jax.random.uniform(k_adj, (n, n))
    adj = (rnd < 0.2).astype(jnp.float32)
    adj = jnp.maximum(adj, adj.T)                       # symmetric, undirected
    adj = adj * (1.0 - jnp.eye(n, dtype=jnp.float32))   # no self loops
    feats = jax.random.normal(k_x, (n, in_dim), dtype=jnp.float32)
    w1 = jax.random.normal(k_w1, (in_dim, hid), dtype=jnp.float32) * 0.1
    b1 = jax.random.normal(k_b1, (1, hid), dtype=jnp.float32) * 0.1
    w2 = jax.random.normal(k_w2, (hid, n_class), dtype=jnp.float32) * 0.1
    b2 = jax.random.normal(k_b2, (1, n_class), dtype=jnp.float32) * 0.1
    return feats, adj, w1, b1, w2, b2


if __name__ == "__main__":
    K, NODE_DROPOUT = 8, 0.5
    key = jax.random.PRNGKey(0)
    k1, k2, k3 = jax.random.split(key, 3)

    # Case 1: small widths, f32 adjacency + f32 propagation (exact path).
    feats, adj, w1, b1, w2, b2 = _make_inputs(k1, 32, 16, 32, 8)
    out = grand_forward(feats, adj, w1, b1, w2, b2, K=K, node_dropout=NODE_DROPOUT)
    out = jax.block_until_ready(out)
    ref = _reference(feats, adj, w1, b1, w2, b2, K=K, node_dropout=NODE_DROPOUT)
    assert out.shape == (32, 8)
    assert jnp.allclose(out, ref, atol=1e-4, rtol=1e-4), "case1 mismatch vs reference"

    # Case 2: in_dim spans more 128-lane groups than hid -> W1 pre-projection is
    # hoisted before the propagation (narrow propagated width).
    feats, adj, w1, b1, w2, b2 = _make_inputs(k2, 32, 256, 32, 8)
    out = grand_forward(feats, adj, w1, b1, w2, b2, K=K, node_dropout=NODE_DROPOUT)
    out = jax.block_until_ready(out)
    ref = _reference(feats, adj, w1, b1, w2, b2, K=K, node_dropout=NODE_DROPOUT)
    assert out.shape == (32, 8)
    assert jnp.allclose(out, ref, atol=1e-4, rtol=1e-4), "case2 mismatch vs reference"

    # Case 3: bf16 adjacency (0/1 exact) -> bf16 propagated state on the native
    # MXU path; v accumulator and finalize stay f32 (loose tolerance vs f32 ref).
    feats, adj, w1, b1, w2, b2 = _make_inputs(k3, 32, 16, 32, 8)
    out = grand_forward(feats, adj.astype(jnp.bfloat16), w1, b1, w2, b2,
                        K=K, node_dropout=NODE_DROPOUT)
    out = jax.block_until_ready(out)
    ref = _reference(feats, adj, w1, b1, w2, b2, K=K, node_dropout=NODE_DROPOUT)
    assert out.shape == (32, 8)
    assert jnp.allclose(out, ref, atol=2e-2, rtol=2e-2), "case3 mismatch vs reference"

    print("KERNEL_OK")
</pallas_src>

<mosaic_0001>
module attributes {stable_mosaic.version = 11 : i64} {
  func.func @_grand_kernel(%arg0: i32, %arg1: i32, %arg2: memref<32x16xf32, #tpu.memory_space<vmem>>, %arg3: memref<32x32xf32, #tpu.memory_space<vmem>>, %arg4: memref<16x32xf32, #tpu.memory_space<vmem>>, %arg5: memref<1x32xf32, #tpu.memory_space<vmem>>, %arg6: memref<32x128xf32, #tpu.memory_space<vmem>>, %arg7: memref<1x128xf32, #tpu.memory_space<vmem>>, %arg8: memref<32x128xf32, #tpu.memory_space<vmem>>, %arg9: memref<32x16xf32, #tpu.memory_space<vmem>>, %arg10: memref<32x16xf32, #tpu.memory_space<vmem>>, %arg11: memref<32x16xf32, #tpu.memory_space<vmem>>, %arg12: memref<32x1xf32, #tpu.memory_space<vmem>>) attributes {dimension_semantics = [#tpu.dimension_semantics<arbitrary>, #tpu.dimension_semantics<arbitrary>], iteration_bounds = array<i64: 9, 1>, scalar_prefetch = 0 : i64, scratch_operands = 4 : i64, tpu.core_type = #tpu.core_type<tc>, window_params = [{transform_indices = @transform_0, window_bounds = array<i64: 32, 16>}, {transform_indices = @transform_1, window_bounds = array<i64: 32, 32>}, {pipeline_mode = #tpu.pipeline_mode<synchronous>, transform_indices = @transform_2, window_bounds = array<i64: 16, 32>}, {pipeline_mode = #tpu.pipeline_mode<synchronous>, transform_indices = @transform_3, window_bounds = array<i64: 1, 32>}, {pipeline_mode = #tpu.pipeline_mode<synchronous>, transform_indices = @transform_4, window_bounds = array<i64: 32, 128>}, {pipeline_mode = #tpu.pipeline_mode<synchronous>, transform_indices = @transform_5, window_bounds = array<i64: 1, 128>}, {transform_indices = @transform_6, window_bounds = array<i64: 32, 128>}]} {
    %c32_i32 = arith.constant 32 : i32
    %0 = arith.muli %arg1, %c32_i32 : i32
    %1 = tpu.assume_multiple %0, 32 : i32
    %c0_i32 = arith.constant 0 : i32
    %2 = arith.cmpi eq, %arg0, %c0_i32 : i32
    %3 = arith.extui %2 : i1 to i32
    %c0_i32_0 = arith.constant 0 : i32
    %4 = arith.cmpi ne, %3, %c0_i32_0 : i32
    scf.if %4 {
      %c0 = arith.constant 0 : index
      %c0_11 = arith.constant 0 : index
      %28 = vector.load %arg3[%c0, %c0_11] : memref<32x32xf32, #tpu.memory_space<vmem>>, vector<32x32xf32>
      %cst = arith.constant dense<0.000000e+00> : vector<32xf32>
      %29 = vector.multi_reduction <add>, %28, %cst [1] : vector<32x32xf32> to vector<32xf32>
      %30 = vector.shape_cast %29 : vector<32xf32> to vector<32x1xf32>
      %cst_12 = arith.constant 1.000000e+00 : f32
      %31 = vector.broadcast %cst_12 : f32 to vector<32x1xf32>
      %32 = arith.maximumf %30, %31 : vector<32x1xf32>
      %cst_13 = arith.constant 1.000000e+00 : f32
      %33 = vector.broadcast %cst_13 : f32 to vector<32x1xf32>
      %34 = arith.divf %33, %32 : vector<32x1xf32>
      %35 = arith.index_cast %1 : i32 to index
      %c0_14 = arith.constant 0 : index
      %36 = vector.load %arg12[%35, %c0_14] : memref<32x1xf32, #tpu.memory_space<vmem>>, vector<32x1xf32>
      tpu.vector_store %arg12[%35, %c0_14], %34 {strides = array<i32>} : memref<32x1xf32, #tpu.memory_space<vmem>>, vector<32x1xf32>,
      %c0_15 = arith.constant 0 : index
      %c0_16 = arith.constant 0 : index
      %37 = vector.load %arg2[%c0_15, %c0_16] : memref<32x16xf32, #tpu.memory_space<vmem>>, vector<32x16xf32>
      %38 = math.rsqrt %32 : vector<32x1xf32>
      %39 = vector.broadcast %38 : vector<32x1xf32> to vector<32x16xf32>
      %40 = arith.mulf %37, %39 : vector<32x16xf32>
      %41 = arith.index_cast %1 : i32 to index
      %c0_17 = arith.constant 0 : index
      %42 = vector.load %arg9[%41, %c0_17] : memref<32x16xf32, #tpu.memory_space<vmem>>, vector<32x16xf32>
      tpu.vector_store %arg9[%41, %c0_17], %40 {strides = array<i32>} : memref<32x16xf32, #tpu.memory_space<vmem>>, vector<32x16xf32>,
      %43 = arith.index_cast %1 : i32 to index
      %c0_18 = arith.constant 0 : index
      %44 = vector.load %arg11[%43, %c0_18] : memref<32x16xf32, #tpu.memory_space<vmem>>, vector<32x16xf32>
      tpu.vector_store %arg11[%43, %c0_18], %40 {strides = array<i32>} : memref<32x16xf32, #tpu.memory_space<vmem>>, vector<32x16xf32>,
    } else {
    }
    %c2_i32 = arith.constant 2 : i32
    %c0_i32_1 = arith.constant 0 : i32
    %5 = arith.cmpi eq, %c2_i32, %c0_i32_1 : i32
    %c1_i32 = arith.constant 1 : i32
    %6 = arith.select %5, %c1_i32, %c2_i32 : i32
    %7 = arith.remsi %arg0, %6 : i32
    %c0_i32_2 = arith.constant 0 : i32
    %8 = arith.cmpi ne, %7, %c0_i32_2 : i32
    %c0_i32_3 = arith.constant 0 : i32
    %9 = arith.cmpi slt, %7, %c0_i32_3 : i32
    %c0_i32_4 = arith.constant 0 : i32
    %10 = arith.cmpi slt, %6, %c0_i32_4 : i32
    %11 = arith.xori %9, %10 : i1
    %12 = arith.andi %11, %8 : i1
    %13 = arith.addi %7, %6 : i32
    %14 = arith.select %12, %13, %7 : i32
    %c1_i32_5 = arith.constant 1 : i32
    %15 = arith.cmpi eq, %14, %c1_i32_5 : i32
    %c0_i32_6 = arith.constant 0 : i32
    %16 = arith.cmpi sgt, %arg0, %c0_i32_6 : i32
    %17 = arith.andi %16, %15 : i1
    %18 = arith.extui %17 : i1 to i32
    %c0_i32_7 = arith.constant 0 : i32
    %19 = arith.cmpi ne, %18, %c0_i32_7 : i32
    scf.if %19 {
      %c0 = arith.constant 0 : index
      %c0_11 = arith.constant 0 : index
      %28 = vector.load %arg3[%c0, %c0_11] : memref<32x32xf32, #tpu.memory_space<vmem>>, vector<32x32xf32>
      %c0_12 = arith.constant 0 : index
      %c0_13 = arith.constant 0 : index
      %29 = vector.load %arg9[%c0_12, %c0_13] : memref<32x16xf32, #tpu.memory_space<vmem>>, vector<32x16xf32>
      %cst = arith.constant dense<0.000000e+00> : vector<32x16xf32>
      %30 = tpu.matmul %28, %29, %cst {dimension_numbers = #tpu.dot_dimension_numbers<[1], [0], [0], [1], [0, 0, 1, 1], [], []>} : vector<32x32xf32>, vector<32x16xf32>, vector<32x16xf32> -> vector<32x16xf32>
      %31 = arith.index_cast %1 : i32 to index
      %c0_14 = arith.constant 0 : index
      %32 = vector.load %arg12[%31, %c0_14] : memref<32x1xf32, #tpu.memory_space<vmem>>, vector<32x1xf32>
      %33 = vector.broadcast %32 : vector<32x1xf32> to vector<32x16xf32>
      %34 = arith.mulf %30, %33 : vector<32x16xf32>
      %35 = arith.index_cast %1 : i32 to index
      %c0_15 = arith.constant 0 : index
      %36 = vector.load %arg10[%35, %c0_15] : memref<32x16xf32, #tpu.memory_space<vmem>>, vector<32x16xf32>
      tpu.vector_store %arg10[%35, %c0_15], %34 {strides = array<i32>} : memref<32x16xf32, #tpu.memory_space<vmem>>, vector<32x16xf32>,
      %37 = arith.index_cast %1 : i32 to index
      %c0_16 = arith.constant 0 : index
      %38 = vector.load %arg11[%37, %c0_16] : memref<32x16xf32, #tpu.memory_space<vmem>>, vector<32x16xf32>
      %39 = arith.addf %38, %34 : vector<32x16xf32>
      %40 = arith.index_cast %1 : i32 to index
      %c0_17 = arith.constant 0 : index
      %41 = vector.load %arg11[%40, %c0_17] : memref<32x16xf32, #tpu.memory_space<vmem>>, vector<32x16xf32>
      tpu.vector_store %arg11[%40, %c0_17], %39 {strides = array<i32>} : memref<32x16xf32, #tpu.memory_space<vmem>>, vector<32x16xf32>,
    } else {
    }
    %c0_i32_8 = arith.constant 0 : i32
    %20 = arith.cmpi sgt, %arg0, %c0_i32_8 : i32
    %true = arith.constant true
    %21 = arith.xori %15, %true : i1
    %22 = arith.andi %20, %21 : i1
    %23 = arith.extui %22 : i1 to i32
    %c0_i32_9 = arith.constant 0 : i32
    %24 = arith.cmpi ne, %23, %c0_i32_9 : i32
    scf.if %24 {
      %c0 = arith.constant 0 : index
      %c0_11 = arith.constant 0 : index
      %28 = vector.load %arg3[%c0, %c0_11] : memref<32x32xf32, #tpu.memory_space<vmem>>, vector<32x32xf32>
      %c0_12 = arith.constant 0 : index
      %c0_13 = arith.constant 0 : index
      %29 = vector.load %arg10[%c0_12, %c0_13] : memref<32x16xf32, #tpu.memory_space<vmem>>, vector<32x16xf32>
      %cst = arith.constant dense<0.000000e+00> : vector<32x16xf32>
      %30 = tpu.matmul %28, %29, %cst {dimension_numbers = #tpu.dot_dimension_numbers<[1], [0], [0], [1], [0, 0, 1, 1], [], []>} : vector<32x32xf32>, vector<32x16xf32>, vector<32x16xf32> -> vector<32x16xf32>
      %31 = arith.index_cast %1 : i32 to index
      %c0_14 = arith.constant 0 : index
      %32 = vector.load %arg12[%31, %c0_14] : memref<32x1xf32, #tpu.memory_space<vmem>>, vector<32x1xf32>
      %33 = vector.broadcast %32 : vector<32x1xf32> to vector<32x16xf32>
      %34 = arith.mulf %30, %33 : vector<32x16xf32>
      %35 = arith.index_cast %1 : i32 to index
      %c0_15 = arith.constant 0 : index
      %36 = vector.load %arg9[%35, %c0_15] : memref<32x16xf32, #tpu.memory_space<vmem>>, vector<32x16xf32>
      tpu.vector_store %arg9[%35, %c0_15], %34 {strides = array<i32>} : memref<32x16xf32, #tpu.memory_space<vmem>>, vector<32x16xf32>,
      %37 = arith.index_cast %1 : i32 to index
      %c0_16 = arith.constant 0 : index
      %38 = vector.load %arg11[%37, %c0_16] : memref<32x16xf32, #tpu.memory_space<vmem>>, vector<32x16xf32>
      %39 = arith.addf %38, %34 : vector<32x16xf32>
      %40 = arith.index_cast %1 : i32 to index
      %c0_17 = arith.constant 0 : index
      %41 = vector.load %arg11[%40, %c0_17] : memref<32x16xf32, #tpu.memory_space<vmem>>, vector<32x16xf32>
      tpu.vector_store %arg11[%40, %c0_17], %39 {strides = array<i32>} : memref<32x16xf32, #tpu.memory_space<vmem>>, vector<32x16xf32>,
    } else {
    }
    %c8_i32 = arith.constant 8 : i32
    %25 = arith.cmpi eq, %arg0, %c8_i32 : i32
    %26 = arith.extui %25 : i1 to i32
    %c0_i32_10 = arith.constant 0 : i32
    %27 = arith.cmpi ne, %26, %c0_i32_10 : i32
    scf.if %27 {
      %28 = arith.index_cast %1 : i32 to index
      %c0 = arith.constant 0 : index
      %29 = vector.load %arg12[%28, %c0] : memref<32x1xf32, #tpu.memory_space<vmem>>, vector<32x1xf32>
      %30 = math.rsqrt %29 : vector<32x1xf32>
      %31 = arith.index_cast %1 : i32 to index
      %c0_11 = arith.constant 0 : index
      %32 = vector.load %arg11[%31, %c0_11] : memref<32x16xf32, #tpu.memory_space<vmem>>, vector<32x16xf32>
      %cst = arith.constant 0.055555556 : f32
      %33 = vector.broadcast %cst : f32 to vector<32x1xf32>
      %34 = arith.mulf %30, %33 : vector<32x1xf32>
      %35 = vector.broadcast %34 : vector<32x1xf32> to vector<32x16xf32>
      %36 = arith.mulf %32, %35 : vector<32x16xf32>
      %c0_12 = arith.constant 0 : index
      %c0_13 = arith.constant 0 : index
      %37 = vector.load %arg4[%c0_12, %c0_13] : memref<16x32xf32, #tpu.memory_space<vmem>>, vector<16x32xf32>
      %cst_14 = arith.constant dense<0.000000e+00> : vector<32x32xf32>
      %38 = tpu.matmul %36, %37, %cst_14 {dimension_numbers = #tpu.dot_dimension_numbers<[1], [0], [0], [1], [0, 0, 1, 1], [], []>} : vector<32x16xf32>, vector<16x32xf32>, vector<32x32xf32> -> vector<32x32xf32>
      %c0_15 = arith.constant 0 : index
      %c0_16 = arith.constant 0 : index
      %39 = vector.load %arg5[%c0_15, %c0_16] : memref<1x32xf32, #tpu.memory_space<vmem>>, vector<1x32xf32>
      %40 = vector.broadcast %39 : vector<1x32xf32> to vector<32x32xf32>
      %41 = arith.addf %38, %40 : vector<32x32xf32>
      %cst_17 = arith.constant 0.000000e+00 : f32
      %42 = vector.broadcast %cst_17 : f32 to vector<32x32xf32>
      %43 = arith.maximumf %41, %42 : vector<32x32xf32>
      %c0_18 = arith.constant 0 : index
      %c0_19 = arith.constant 0 : index
      %44 = vector.load %arg6[%c0_18, %c0_19] : memref<32x128xf32, #tpu.memory_space<vmem>>, vector<32x128xf32>
      %cst_20 = arith.constant dense<0.000000e+00> : vector<32x128xf32>
      %45 = tpu.matmul %43, %44, %cst_20 {dimension_numbers = #tpu.dot_dimension_numbers<[1], [0], [0], [1], [0, 0, 1, 1], [], []>} : vector<32x32xf32>, vector<32x128xf32>, vector<32x128xf32> -> vector<32x128xf32>
      %c0_21 = arith.constant 0 : index
      %c0_22 = arith.constant 0 : index
      %46 = vector.load %arg7[%c0_21, %c0_22] : memref<1x128xf32, #tpu.memory_space<vmem>>, vector<1x128xf32>
      %47 = vector.broadcast %46 : vector<1x128xf32> to vector<32x128xf32>
      %48 = arith.addf %45, %47 : vector<32x128xf32>
      %cst_23 = arith.constant dense<0xFF800000> : vector<32xf32>
      %49 = vector.multi_reduction <maximumf>, %48, %cst_23 [1] : vector<32x128xf32> to vector<32xf32>
      %50 = vector.shape_cast %49 : vector<32xf32> to vector<32x1xf32>
      %51 = vector.broadcast %50 : vector<32x1xf32> to vector<32x128xf32>
      %52 = arith.subf %48, %51 : vector<32x128xf32>
      %53 = math.exp %52 : vector<32x128xf32>
      %cst_24 = arith.constant dense<0.000000e+00> : vector<32xf32>
      %54 = vector.multi_reduction <add>, %53, %cst_24 [1] : vector<32x128xf32> to vector<32xf32>
      %55 = vector.shape_cast %54 : vector<32xf32> to vector<32x1xf32>
      %56 = math.log %55 : vector<32x1xf32>
      %57 = arith.addf %50, %56 : vector<32x1xf32>
      %58 = vector.broadcast %57 : vector<32x1xf32> to vector<32x128xf32>
      %59 = arith.subf %48, %58 : vector<32x128xf32>
      %c0_25 = arith.constant 0 : index
      %c0_26 = arith.constant 0 : index
      %60 = vector.load %arg8[%c0_25, %c0_26] : memref<32x128xf32, #tpu.memory_space<vmem>>, vector<32x128xf32>
      tpu.vector_store %arg8[%c0_25, %c0_26], %59 {strides = array<i32>} : memref<32x128xf32, #tpu.memory_space<vmem>>, vector<32x128xf32>,
    } else {
    }
    return
  }
  func.func @transform_0(%arg0: i32, %arg1: i32) -> (i32, i32) {
    %c0_i32 = arith.constant 0 : i32
    %0 = arith.cmpi eq, %arg0, %c0_i32 : i32
    %c0_i32_0 = arith.constant 0 : i32
    %1 = arith.select %0, %arg1, %c0_i32_0 : i32
    %c0_i32_1 = arith.constant 0 : i32
    %c0_i32_2 = arith.constant 0 : i32
    return %1, %c0_i32_1 : i32, i32
  }
  func.func @transform_1(%arg0: i32, %arg1: i32) -> (i32, i32) {
    %c0_i32 = arith.constant 0 : i32
    %c0_i32_0 = arith.constant 0 : i32
    return %arg1, %c0_i32 : i32, i32
  }
  func.func @transform_2(%arg0: i32, %arg1: i32) -> (i32, i32) {
    %c0_i32 = arith.constant 0 : i32
    %c0_i32_0 = arith.constant 0 : i32
    %c0_i32_1 = arith.constant 0 : i32
    return %c0_i32, %c0_i32_0 : i32, i32
  }
  func.func @transform_3(%arg0: i32, %arg1: i32) -> (i32, i32) {
    %c0_i32 = arith.constant 0 : i32
    %c0_i32_0 = arith.constant 0 : i32
    %c0_i32_1 = arith.constant 0 : i32
    return %c0_i32, %c0_i32_0 : i32, i32
  }
  func.func @transform_4(%arg0: i32, %arg1: i32) -> (i32, i32) {
    %c0_i32 = arith.constant 0 : i32
    %c0_i32_0 = arith.constant 0 : i32
    %c0_i32_1 = arith.constant 0 : i32
    return %c0_i32, %c0_i32_0 : i32, i32
  }
  func.func @transform_5(%arg0: i32, %arg1: i32) -> (i32, i32) {
    %c0_i32 = arith.constant 0 : i32
    %c0_i32_0 = arith.constant 0 : i32
    %c0_i32_1 = arith.constant 0 : i32
    return %c0_i32, %c0_i32_0 : i32, i32
  }
  func.func @transform_6(%arg0: i32, %arg1: i32) -> (i32, i32) {
    %c8_i32 = arith.constant 8 : i32
    %0 = arith.cmpi eq, %arg0, %c8_i32 : i32
    %c0_i32 = arith.constant 0 : i32
    %1 = arith.select %0, %arg1, %c0_i32 : i32
    %c0_i32_0 = arith.constant 0 : i32
    %c0_i32_1 = arith.constant 0 : i32
    return %1, %c0_i32_0 : i32, i32
  }
}

</mosaic_0001>

<llo_original>
// kernel: tpu_custom_call.1
$region0: #{tpu_custom_call.1}
  #allocation0 [shape = 'u32[]', space=smem, size = 0x4, offset = 0x4, fixed_abs, tag = 'smem constant byte address 0x4 - core index']
  #allocation1 [shape = 'u32[144,128]{1,0:T(1,128)}', space=vmem, size = 0x12000, scoped, tag = 'internal scratch']
  #allocation2 [shape = 'f32[32,16]{1,0:T(8,128)}', space=vmem, size = 0x4000, scoped, tag = 'scratch operand']
  #allocation3 [shape = 'f32[32,16]{1,0:T(8,128)}', space=vmem, size = 0x4000, scoped, tag = 'scratch operand']
  #allocation4 [shape = 'f32[32,16]{1,0:T(8,128)}', space=vmem, size = 0x4000, scoped, tag = 'scratch operand']
  #allocation5 [shape = 'f32[32,1]{1,0:T(8,128)}', space=vmem, size = 0x4000, scoped, tag = 'scratch operand']
  %s0 = inlined_call_operand.vmem [shape: f32[32,16], index: 0, kind: input, shape index: {}]
  %s1 = inlined_call_operand.vmem [shape: f32[32,32], index: 1, kind: input, shape index: {}]
  %s2 = inlined_call_operand.vmem [shape: f32[16,32], index: 2, kind: input, shape index: {}]
  %s3 = inlined_call_operand.vmem [shape: f32[1,32], index: 3, kind: input, shape index: {}]
  %s4 = inlined_call_operand.hbm [shape: f32[32,128], index: 4, kind: input, shape index: {}]
  %s5 = inlined_call_operand.vmem [shape: f32[1,128], index: 5, kind: input, shape index: {}]
  %s6 = inlined_call_operand.hbm [shape: f32[32,128], index: 6, kind: output, shape index: {}]
  %s7 = sld [smem:[#allocation0]]
  $region77: #{tpu_custom_call.1} parent=0
    _
  %s9 = ssub.s32 1, %s7
  %s10 = scalar_select 0, %s9, %s7
  $region1: #{tpu_custom_call.1} parent=0
    #allocation6 [shape = 'u8[16384]{0}', space=vmem, size = 0x4000, scoped, tag = 'input window, operand 4, single buffered']
    #allocation7 [shape = 's32[2]{0}', space=sflag, size = 0x8, scoped, tag = 'scoped memory for tpu_custom_call.1']
    #allocation8 [shape = 's32[2]{0}', space=sflag, size = 0x8, scoped, tag = 'scoped memory for tpu_custom_call.1']
    #allocation9 [shape = 'u8[32768]{0}', space=vmem, size = 0x8000, scoped, tag = 'output window, operand 0']
    %11 = vsyncpa [#allocation7], 0
    %12 = vsyncpa [#allocation8], 0
    %s13 = scalar_lea.sflag [#allocation8], 1
    %14 = vsyncpa %s13, 0
    loop: start=0, step=1, limit=11
    $region2: #{tpu_custom_call.1} parent=1 // loop_pre_header
      _
    $region3: #{tpu_custom_call.1} parent=1 // loop_header
      %s16 = sphi 0, %s20
      %p17 = scmp.ge.s32.totalorder %s16, 11
      %s23 = sphi 0, %s35
      %s24 = sphi 0, %s31
      %s25 = sphi 0, %s23
      %s26 = sphi 0, %s24
      %s27 = sphi 0, %s25
      %s28 = sphi 0, %s26
      %s42 = sphi 0, %s44
      %s45 = sphi 0, %s42
      %s46 = sphi 0, %s45
      %s62 = sphi 0, %s46
      %s68 = sphi 0, %s70
      %s71 = sphi 0, %s68
      %s72 = sphi 0, %s71
      %s88 = sphi 0, %s72
      %s92 = sphi 0, %s92
      %s94 = sphi 0, %s92
      %s95 = sphi 0, %s94
      %s109 = sphi 0, %s95
      %s113 = sphi 0, %s113
      %s115 = sphi 0, %s113
      %s116 = sphi 0, %s115
      %s130 = sphi 0, %s116
      %s134 = sphi 0, %s134
      %s136 = sphi 0, %s134
      %s137 = sphi 0, %s136
      %s151 = sphi 0, %s137
      %s155 = sphi 0, %s155
      %s157 = sphi 0, %s155
      %s158 = sphi 0, %s157
      %s172 = sphi 0, %s158
      %s182 = sphi 0, %s184
      %s185 = sphi 0, %s182
      %s186 = sphi 0, %s185
      %s202 = sphi 0, %s186
    $region4: #{tpu_custom_call.1} parent=1 // loop_header_branch
      %19 = sbr.rel (%p17) target = $region8
    $region5: #{tpu_custom_call.1} parent=1 // loop_body
      %s21 = ssub.s32 %s16, 1
      %s22 = ssub.s32 %s16, 2
      %s29 = sadd.s32 1, %s24
      %p30 = scmp.ge.s32.totalorder %s29, 1
      %s31 = scalar_select %p30, 0, %s29
      %s32 = sadd.s32 1, %s23
      %s33 = scalar_select %p30, %s32, %s23
      %p34 = scmp.ge.s32.totalorder %s33, 9
      %s35 = scalar_select %p34, 0, %s33
      %p36 = scmp.eq.s32.totalorder %s23, 0
      %s37 = scalar_select %p36, %s24, 0
      %p38 = scmp.eq.s32.totalorder %s35, 0
      %s39 = scalar_select %p38, %s31, 0
      %s40 = ssub.s32 %s37, %s39
      %p41 = scmp.eq.s32.totalorder %s40, 0
      %s43 = sadd.s32 %s42, 1
      %s44 = scalar_select %p41, %s42, %s43
      %p47 = pneg %p41
      %p48 = scmp.eq.s32.totalorder %s16, 8
      %p49 = por %p47, %p48
      %p50 = scmp.ne.s32.totalorder %s42, %s45
      %p51 = scmp.eq.s32.totalorder %s16, 0
      %p52 = por %p50, %p51
      %p53 = scmp.ne.s32.totalorder %s42, %s45
      %p54 = scmp.eq.s32.totalorder %s21, 8
      %p55 = por %p53, %p54
      %p56 = scmp.ne.s32.totalorder %s45, %s46
      %p57 = scmp.eq.s32.totalorder %s21, 0
      %p58 = por %p56, %p57
      %p59 = scmp.ne.s32.totalorder %s45, %s46
      %p60 = scmp.eq.s32.totalorder %s22, 8
      %p61 = por %p59, %p60
      %p63 = scmp.ne.s32.totalorder %s46, %s62
      %p64 = scmp.eq.s32.totalorder %s22, 0
      %p65 = por %p63, %p64
      %s66 = ssub.s32 %s24, %s31
      %p67 = scmp.eq.s32.totalorder %s66, 0
      %s69 = sadd.s32 %s68, 1
      %s70 = scalar_select %p67, %s68, %s69
      %p73 = pneg %p67
      %p74 = scmp.eq.s32.totalorder %s16, 8
      %p75 = por %p73, %p74
      %p76 = scmp.ne.s32.totalorder %s68, %s71
      %p77 = scmp.eq.s32.totalorder %s16, 0
      %p78 = por %p76, %p77
      %p79 = scmp.ne.s32.totalorder %s68, %s71
      %p80 = scmp.eq.s32.totalorder %s21, 8
      %p81 = por %p79, %p80
      %p82 = scmp.ne.s32.totalorder %s71, %s72
      %p83 = scmp.eq.s32.totalorder %s21, 0
      %p84 = por %p82, %p83
      %p85 = scmp.ne.s32.totalorder %s71, %s72
      %p86 = scmp.eq.s32.totalorder %s22, 8
      %p87 = por %p85, %p86
      %p89 = scmp.ne.s32.totalorder %s72, %s88
      %p90 = scmp.eq.s32.totalorder %s22, 0
      %p91 = por %p89, %p90
      %s93 = sadd.s32 %s92, 1
      %p96 = scmp.eq.s32.totalorder %s16, 8
      %p97 = scmp.ne.s32.totalorder %s92, %s94
      %p98 = scmp.eq.s32.totalorder %s16, 0
      %p99 = por %p97, %p98
      %p100 = scmp.ne.s32.totalorder %s92, %s94
      %p101 = scmp.eq.s32.totalorder %s21, 8
      %p102 = por %p100, %p101
      %p103 = scmp.ne.s32.totalorder %s94, %s95
      %p104 = scmp.eq.s32.totalorder %s21, 0
      %p105 = por %p103, %p104
      %p106 = scmp.ne.s32.totalorder %s94, %s95
      %p107 = scmp.eq.s32.totalorder %s22, 8
      %p108 = por %p106, %p107
      %p110 = scmp.ne.s32.totalorder %s95, %s109
      %p111 = scmp.eq.s32.totalorder %s22, 0
      %p112 = por %p110, %p111
      %s114 = sadd.s32 %s113, 1
      %p117 = scmp.eq.s32.totalorder %s16, 8
      %p118 = scmp.ne.s32.totalorder %s113, %s115
      %p119 = scmp.eq.s32.totalorder %s16, 0
      %p120 = por %p118, %p119
      %p121 = scmp.ne.s32.totalorder %s113, %s115
      %p122 = scmp.eq.s32.totalorder %s21, 8
      %p123 = por %p121, %p122
      %p124 = scmp.ne.s32.totalorder %s115, %s116
      %p125 = scmp.eq.s32.totalorder %s21, 0
      %p126 = por %p124, %p125
      %p127 = scmp.ne.s32.totalorder %s115, %s116
      %p128 = scmp.eq.s32.totalorder %s22, 8
      %p129 = por %p127, %p128
      %p131 = scmp.ne.s32.totalorder %s116, %s130
      %p132 = scmp.eq.s32.totalorder %s22, 0
      %p133 = por %p131, %p132
      %s135 = sadd.s32 %s134, 1
      %p138 = scmp.eq.s32.totalorder %s16, 8
      %p139 = scmp.ne.s32.totalorder %s134, %s136
      %p140 = scmp.eq.s32.totalorder %s16, 0
      %p141 = por %p139, %p140
      %p142 = scmp.ne.s32.totalorder %s134, %s136
      %p143 = scmp.eq.s32.totalorder %s21, 8
      %p144 = por %p142, %p143
      %p145 = scmp.ne.s32.totalorder %s136, %s137
      %p146 = scmp.eq.s32.totalorder %s21, 0
      %p147 = por %p145, %p146
      %p148 = scmp.ne.s32.totalorder %s136, %s137
      %p149 = scmp.eq.s32.totalorder %s22, 8
      %p150 = por %p148, %p149
      %p152 = scmp.ne.s32.totalorder %s137, %s151
      %p153 = scmp.eq.s32.totalorder %s22, 0
      %p154 = por %p152, %p153
      %s156 = sadd.s32 %s155, 1
      %p159 = scmp.eq.s32.totalorder %s16, 8
      %p160 = scmp.ne.s32.totalorder %s155, %s157
      %p161 = scmp.eq.s32.totalorder %s16, 0
      %p162 = por %p160, %p161
      %p163 = scmp.ne.s32.totalorder %s155, %s157
      %p164 = scmp.eq.s32.totalorder %s21, 8
      %p165 = por %p163, %p164
      %p166 = scmp.ne.s32.totalorder %s157, %s158
      %p167 = scmp.eq.s32.totalorder %s21, 0
      %p168 = por %p166, %p167
      %p169 = scmp.ne.s32.totalorder %s157, %s158
      %p170 = scmp.eq.s32.totalorder %s22, 8
      %p171 = por %p169, %p170
      %p173 = scmp.ne.s32.totalorder %s158, %s172
      %p174 = scmp.eq.s32.totalorder %s22, 0
      %p175 = por %p173, %p174
      %p176 = scmp.eq.s32.totalorder %s23, 8
      %s177 = scalar_select %p176, %s24, 0
      %p178 = scmp.eq.s32.totalorder %s35, 8
      %s179 = scalar_select %p178, %s31, 0
      %s180 = ssub.s32 %s177, %s179
      %p181 = scmp.eq.s32.totalorder %s180, 0
      %s183 = sadd.s32 %s182, 1
      %s184 = scalar_select %p181, %s182, %s183
      %p187 = pneg %p181
      %p188 = scmp.eq.s32.totalorder %s16, 8
      %p189 = por %p187, %p188
      %p190 = scmp.ne.s32.totalorder %s182, %s185
      %p191 = scmp.eq.s32.totalorder %s16, 0
      %p192 = por %p190, %p191
      %p193 = scmp.ne.s32.totalorder %s182, %s185
      %p194 = scmp.eq.s32.totalorder %s21, 8
      %p195 = por %p193, %p194
      %p196 = scmp.ne.s32.totalorder %s185, %s186
      %p197 = scmp.eq.s32.totalorder %s21, 0
      %p198 = por %p196, %p197
      %p199 = scmp.ne.s32.totalorder %s185, %s186
      %p200 = scmp.eq.s32.totalorder %s22, 8
      %p201 = por %p199, %p200
      %p203 = scmp.ne.s32.totalorder %s186, %s202
      %p204 = scmp.eq.s32.totalorder %s22, 0
      %p205 = por %p203, %p204
      %p206 = scmp.le.s32.totalorder 1, %s16
      %p207 = scmp.lt.s32.totalorder %s16, 10
      %p208 = pnand %p206, %p207
      %p209 = pneg %p208
      // Predicated region
      $region9: #{tpu_custom_call.1} parent=5 // pred_check
        _
      $region10: #{tpu_custom_call.1} parent=5 // pred_check_branch
        %211 = sbr.rel (%p208) target = $region12
      $region11: #{tpu_custom_call.1} parent=5 // pred_region
        %s212 = ssub.s32 %s16, 1
        // Predicated region
        $region13: #{tpu_custom_call.1} parent=11 // pred_check
          %p213 = pneg %p84
        $region14: #{tpu_custom_call.1} parent=11 // pred_check_branch
          %215 = sbr.rel (%p213) target = $region16
        $region15: #{tpu_custom_call.1} parent=11 // pred_region
          %s216 = smul.u32 4, %s26
          %p217 = scmp.lt.s32.totalorder %s216, 3
          %s218 = scalar_select %p217, %s216, 3
          %s219 = smul.addr %s218, 8
          %s220 = scalar_lea.vmem %s1, %s219
          %s221 = smul.u32 4, %s26
        $region16: #{tpu_custom_call.1} parent=11 // pred_fallthru
          _
        // Predicated region
        $region17: #{tpu_custom_call.1} parent=11 // pred_check
          %p222 = pneg %p105
        $region18: #{tpu_custom_call.1} parent=11 // pred_check_branch
          %224 = sbr.rel (%p222) target = $region20
        $region19: #{tpu_custom_call.1} parent=11 // pred_region
          _
        $region20: #{tpu_custom_call.1} parent=11 // pred_fallthru
          _
        // Predicated region
        $region21: #{tpu_custom_call.1} parent=11 // pred_check
          %p225 = pneg %p126
        $region22: #{tpu_custom_call.1} parent=11 // pred_check_branch
          %227 = sbr.rel (%p225) target = $region24
        $region23: #{tpu_custom_call.1} parent=11 // pred_region
          _
        $region24: #{tpu_custom_call.1} parent=11 // pred_fallthru
          _
        // Predicated region
        $region25: #{tpu_custom_call.1} parent=11 // pred_check
          %p228 = pneg %p147
        $region26: #{tpu_custom_call.1} parent=11 // pred_check_branch
          %230 = sbr.rel (%p228) target = $region28
        $region27: #{tpu_custom_call.1} parent=11 // pred_region
          %s232 = ssub.s32 512, 512
          %233 = vsyncadd [#allocation7], %s232
          %s234 = sshll.u32 [#allocation6], 4
          %s235 = int_to_ptr.vmem [resolvable:$true] %s234
          %240 = dma.hbm_to_vmem [thread:$0]  %s4, 512, %s235, [#allocation7], 128, 128, 8
        $region28: #{tpu_custom_call.1} parent=11 // pred_fallthru
          _
        // Predicated region
        $region29: #{tpu_custom_call.1} parent=11 // pred_check
          %p241 = pneg %p168
        $region30: #{tpu_custom_call.1} parent=11 // pred_check_branch
          %243 = sbr.rel (%p241) target = $region32
        $region31: #{tpu_custom_call.1} parent=11 // pred_region
          _
        $region32: #{tpu_custom_call.1} parent=11 // pred_fallthru
          _
      $region12: #{tpu_custom_call.1} parent=5 // pred_fallthru
        _
      %p244 = scmp.lt.s32.totalorder %s16, 9
      // Predicated region
      $region33: #{tpu_custom_call.1} parent=5 // pred_check
        %p245 = pneg %p244
      $region34: #{tpu_custom_call.1} parent=5 // pred_check_branch
        %247 = sbr.rel (%p245) target = $region36
      $region35: #{tpu_custom_call.1} parent=5 // pred_region
        // Predicated region
        $region37: #{tpu_custom_call.1} parent=35 // pred_check
          %p248 = pneg %p52
        $region38: #{tpu_custom_call.1} parent=35 // pred_check_branch
          %250 = sbr.rel (%p248) target = $region40
        $region39: #{tpu_custom_call.1} parent=35 // pred_region
          %p251 = scmp.eq.s32.totalorder %s23, 0
          %s252 = scalar_select %p251, %s24, 0
          %s253 = smul.u32 4, %s252
          %p254 = scmp.lt.s32.totalorder %s253, 3
          %s255 = scalar_select %p254, %s253, 3
          %s256 = smul.addr %s255, 8
          %s257 = scalar_lea.vmem %s0, %s256
          %p258 = scmp.eq.s32.totalorder %s23, 0
          %s259 = scalar_select %p258, %s24, 0
          %s260 = smul.u32 4, %s259
        $region40: #{tpu_custom_call.1} parent=35 // pred_fallthru
          _
      $region36: #{tpu_custom_call.1} parent=5 // pred_fallthru
        _
      %p261 = scmp.le.s32.totalorder 1, %s16
      %p262 = scmp.lt.s32.totalorder %s16, 10
      %p263 = pnand %p261, %p262
      %p264 = pneg %p263
      // Predicated region
      $region41: #{tpu_custom_call.1} parent=5 // pred_check
        _
      $region42: #{tpu_custom_call.1} parent=5 // pred_check_branch
        %266 = sbr.rel (%p263) target = $region44
      $region43: #{tpu_custom_call.1} parent=5 // pred_region
        %s267 = ssub.s32 %s16, 1
        // Predicated region
        $region45: #{tpu_custom_call.1} parent=43 // pred_check
          %p268 = pneg %p147
        $region46: #{tpu_custom_call.1} parent=43 // pred_check_branch
          %270 = sbr.rel (%p268) target = $region48
        $region47: #{tpu_custom_call.1} parent=43 // pred_region
          %271 = dma.done [#allocation7], 512
        $region48: #{tpu_custom_call.1} parent=43 // pred_fallthru
          _
        %p272 = scmp.eq.s32.totalorder %s25, 0
        %s273 = scalar_select %p272, %s26, 0
        %s274 = smul.u32 4, %s273
        %p275 = scmp.lt.s32.totalorder %s274, 3
        %s276 = scalar_select %p275, %s274, 3
        %s277 = smul.addr %s276, 8
        %s278 = scalar_lea.vmem %s0, %s277
        %p279 = pneg %p58
        %p280 = pneg %p55
        %s281 = smul.u32 4, %s26
        %p282 = scmp.lt.s32.totalorder %s281, 3
        %s283 = scalar_select %p282, %s281, 3
        %s284 = smul.addr %s283, 8
        %s285 = scalar_lea.vmem %s1, %s284
        %p286 = pneg %p84
        %p287 = pneg %p81
        %p288 = pneg %p105
        %p289 = pneg %p102
        %p290 = pneg %p126
        %p291 = pneg %p123
        %p292 = pneg %p147
        %p293 = pneg %p144
        %p294 = pneg %p168
        %p295 = pneg %p165
        %p296 = pneg %p198
        %p297 = pneg %p195
        %s298 = sand.u32 %s185, 1
        %s299 = scalar_lea.sflag [#allocation8], %s298
        %s300 = sand.u32 %s185, 1
        %s301 = smul.addr %s300, 32
        %s302 = scalar_lea.vmem [#allocation9], %s301
        %p303 = scmp.eq.s32.totalorder %s25, 0
        %s304 = scalar_select %p303, %s26, 0
        %s305 = smul.u32 4, %s304
        %p306 = scmp.lt.s32.totalorder %s305, 3
        %s307 = scalar_select %p306, %s305, 3
        %s308 = smul.addr %s307, 8
        %s309 = scalar_lea.vmem %s0, %s308
        %p310 = scmp.eq.s32.totalorder %s25, 0
        %s311 = scalar_select %p310, %s26, 0
        %s312 = smul.u32 4, %s311
        %s313 = smul.u32 4, %s26
        %p314 = scmp.lt.s32.totalorder %s313, 3
        %s315 = scalar_select %p314, %s313, 3
        %s316 = smul.addr %s315, 8
        %s317 = scalar_lea.vmem %s1, %s316
        %s318 = smul.u32 4, %s26
        %p319 = scmp.eq.s32.totalorder %s25, 8
        %s320 = scalar_select %p319, %s26, 0
        %s321 = smul.u32 4, %s320
        %s322 = smul.u32 %s26, 32
        %p323 = scmp.eq.s32.totalorder %s25, 0
        // Predicated region
        $region49: #{tpu_custom_call.1} parent=43 // pred_check
          %p324 = pneg %p323
        $region50: #{tpu_custom_call.1} parent=43 // pred_check_branch
          %326 = sbr.rel (%p324) target = $region52
        $region51: #{tpu_custom_call.1} parent=43 // pred_region
          %v327 = vld [vmem:[%s317] sm:$0xff]
          %v328 = vld [vmem:[%s317 + $0x8] sm:$0xff]
          %v329 = vld [vmem:[%s317 + $0x10] sm:$0xff]
          %v330 = vld [vmem:[%s317 + $0x18] sm:$0xff]
          %vm331 = vcmask 261120
          %v332 = vsel %vm331, %v327, 0.0
          %333 = vadd.xlane.f32.xlu0 %v332
          %v334 = vpop.xlane.xlu0 %333
          %v335 = vsel %vm331, %v328, 0.0
          %336 = vadd.xlane.f32.xlu0 %v335
          %v337 = vpop.xlane.xlu0 %336
          %v338 = vsel %vm331, %v329, 0.0
          %339 = vadd.xlane.f32.xlu0 %v338
          %v340 = vpop.xlane.xlu0 %339
          %v341 = vsel %vm331, %v330, 0.0
          %342 = vadd.xlane.f32.xlu0 %v341
          %v343 = vpop.xlane.xlu0 %342
          %v344 = vmax.f32 %v334, 1.0
          %v345 = vmax.f32 %v337, 1.0
          %v346 = vmax.f32 %v340, 1.0
          %v347 = vmax.f32 %v343, 1.0
          %v348 = vrcp.pop %v344
          %v349 = vmul.f32 1.0, %v348
          %v350 = vrcp.pop %v345
          %v351 = vmul.f32 1.0, %v350
          %v352 = vrcp.pop %v346
          %v353 = vmul.f32 1.0, %v352
          %v354 = vrcp.pop %v347
          %v355 = vmul.f32 1.0, %v354
          %s356 = scalar_lea.vmem [#allocation5], %s322
          %vm357 = vcmask 7168
          %358 = vst.msk [vmem:[%s356] sm:$0xff] %vm357, %v349
          %359 = vst.msk [vmem:[%s356 + $0x8] sm:$0xff] %vm357, %v351
          %360 = vst.msk [vmem:[%s356 + $0x10] sm:$0xff] %vm357, %v353
          %361 = vst.msk [vmem:[%s356 + $0x18] sm:$0xff] %vm357, %v355
          %v362 = vld [vmem:[%s309] sm:$0xff]
          %v363 = vld [vmem:[%s309 + $0x8] sm:$0xff]
          %v364 = vld [vmem:[%s309 + $0x10] sm:$0xff]
          %v365 = vld [vmem:[%s309 + $0x18] sm:$0xff]
          %v366 = vrsqrt.pop %v344
          %v367 = vrsqrt.pop %v345
          %v368 = vrsqrt.pop %v346
          %v369 = vrsqrt.pop %v347
          %v370 = vmul.f32 %v362, %v366
          %v371 = vmul.f32 %v363, %v367
          %v372 = vmul.f32 %v364, %v368
          %v373 = vmul.f32 %v365, %v369
          %s374 = scalar_lea.vmem [#allocation2], %s322
          %vm375 = vcmask 130048
          %376 = vst.msk [vmem:[%s374] sm:$0xff] %vm375, %v370
          %377 = vst.msk [vmem:[%s374 + $0x8] sm:$0xff] %vm375, %v371
          %378 = vst.msk [vmem:[%s374 + $0x10] sm:$0xff] %vm375, %v372
          %379 = vst.msk [vmem:[%s374 + $0x18] sm:$0xff] %vm375, %v373
          %s380 = scalar_lea.vmem [#allocation4], %s322
          %381 = vst.msk [vmem:[%s380] sm:$0xff] %vm375, %v370
          %382 = vst.msk [vmem:[%s380 + $0x8] sm:$0xff] %vm375, %v371
          %383 = vst.msk [vmem:[%s380 + $0x10] sm:$0xff] %vm375, %v372
          %384 = vst.msk [vmem:[%s380 + $0x18] sm:$0xff] %vm375, %v373
        $region52: #{tpu_custom_call.1} parent=43 // pred_fallthru
          _
        %p385 = scmp.lt.s32.totalorder %s25, 0
        %s386 = ssub.s32 0, %s25
        %s387 = scalar_select %p385, %s386, %s25
        %s388 = sand.u32 %s387, 1
        %s389 = ssub.s32 0, %s388
        %s390 = scalar_select %p385, %s389, %s388
        %p391 = scmp.ne.s32.totalorder %s390, 0
        %p392 = scmp.lt.s32.totalorder %s390, 0
        %p393 = pnand %p392, %p391
        %p394 = pneg %p393
        %s395 = sadd.s32 %s390, 2
        %s396 = scalar_select %p394, %s395, %s390
        %p397 = scmp.eq.s32.totalorder %s396, 1
        %p398 = scmp.gt.s32.totalorder %s25, 0
        %p399 = pnand %p398, %p397
        %p400 = pneg %p399
        // Predicated region
        $region53: #{tpu_custom_call.1} parent=43 // pred_check
          _
        $region54: #{tpu_custom_call.1} parent=43 // pred_check_branch
          %402 = sbr.rel (%p399) target = $region56
        $region55: #{tpu_custom_call.1} parent=43 // pred_region
          %v403 = vld [vmem:[%s317] sm:$0xff]
          %v404 = vld [vmem:[%s317 + $0x8] sm:$0xff]
          %v405 = vld [vmem:[%s317 + $0x10] sm:$0xff]
          %v406 = vld [vmem:[%s317 + $0x18] sm:$0xff]
          %v407 = vld [vmem:[#allocation2] sm:$0xff]
          %v408 = vld [vmem:[#allocation2 + $0x8] sm:$0xff]
          %v409 = vld [vmem:[#allocation2 + $0x10] sm:$0xff]
          %v410 = vld [vmem:[#allocation2 + $0x18] sm:$0xff]
          %vm411 = vcmask 261120
          %v413 = vsel %vm411, %v403, 0
          %v416 = vsel %vm411, %v404, 0
          %v419 = vsel %vm411, %v405, 0
          %v422 = vsel %vm411, %v406, 0
          %424 = vmatprep.subr.mxu0 0.0
          %425 = vmatpush1.msra.mxu0 %v407
          %426 = vmatprep.subr.mxu0 0.0
          %427 = vmatpush1.msra.mxu0 %v408
          %428 = vmatprep.subr.mxu0 0.0
          %429 = vmatpush1.msra.mxu0 %v409
          %430 = vmatprep.subr.mxu0 0.0
          %431 = vmatpush1.msra.mxu0 %v410
          %432 = vmatprep.subr.mxu0 0.0
          %433 = vmatpush1.msra.mxu0 0.0
          %434 = vmatprep.subr.mxu0 0.0
          %435 = vmatpush1.msra.mxu0 0.0
          %436 = vmatprep.subr.mxu0 0.0
          %437 = vmatpush1.msra.mxu0 0.0
          %438 = vmatprep.subr.mxu0 0.0
          %439 = vmatpush1.msra.mxu0 0.0
          %440 = vmatprep.subr.mxu0 0.0
          %441 = vmatpush1.msra.mxu0 0.0
          %442 = vmatprep.subr.mxu0 0.0
          %443 = vmatpush1.msra.mxu0 0.0
          %444 = vmatprep.subr.mxu0 0.0
          %445 = vmatpush1.msra.mxu0 0.0
          %446 = vmatprep.subr.mxu0 0.0
          %447 = vmatpush1.msra.mxu0 0.0
          %448 = vmatprep.subr.mxu0 0.0
          %449 = vmatpush1.msra.mxu0 0.0
          %450 = vmatprep.subr.mxu0 0.0
          %451 = vmatpush1.msra.mxu0 0.0
          %452 = vmatprep.subr.mxu0 0.0
          %453 = vmatpush1.msra.mxu0 0.0
          %454 = vmatprep.subr.mxu0 0.0
          %455 = vmatpush1.msra.mxu0 0.0
          %456 = vmatprep.subr.mxu0 0.0
          %457 = vmatpush1.msra.mxu0 0.0
          %458 = vmatprep.subr.mxu0 0.0
          %459 = vmatpush1.msra.mxu0 0.0
          %460 = vmatprep.subr.mxu0 0.0
          %461 = vmatpush1.msra.mxu0 0.0
          %462 = vmatprep.subr.mxu0 0.0
          %463 = vmatpush1.msra.mxu0 0.0
          %464 = vmatprep.subr.mxu0 0.0
          %465 = vmatpush1.msra.mxu0 0.0
          %466 = vmatprep.subr.mxu0 0.0
          %467 = vmatpush1.msra.mxu0 0.0
          %468 = vmatprep.subr.mxu0 0.0
          %469 = vmatpush1.msra.mxu0 0.0
          %470 = vmatprep.subr.mxu0 0.0
          %471 = vmatpush1.msra.mxu0 0.0
          %472 = vmatprep.subr.mxu0 0.0
          %473 = vmatpush1.msra.mxu0 0.0
          %474 = vmatprep.subr.mxu0 0.0
          %475 = vmatpush1.msra.mxu0 0.0
          %476 = vmatprep.subr.mxu0 0.0
          %477 = vmatpush1.msra.mxu0 0.0
          %478 = vmatprep.subr.mxu0 0.0
          %479 = vmatpush1.msra.mxu0 0.0
          %480 = vmatprep.subr.mxu0 0.0
          %481 = vmatpush1.msra.mxu0 0.0
          %482 = vmatprep.subr.mxu0 0.0
          %483 = vmatpush1.msra.mxu0 0.0
          %484 = vmatprep.subr.mxu0 0.0
          %485 = vmatpush1.msra.mxu0 0.0
          %486 = vmatprep.subr.mxu0 0.0
          %487 = vmatpush1.msra.mxu0 0.0
          %488 = vmatprep.mubr.f32.mxu0 0.0
          %489 = vmatmul.mubr.f32.gmra.mrb[0].mxu0 %v413
          %v490 = vpop.f32.mrb[0].mxu0
          %v491 = vadd.f32 0.0, %v490
          %v492 = vpop.f32.mrb[0].mxu0
          %493 = vmatprep.mubr.f32.mxu0 0.0
          %494 = vmatmul.mubr.f32.gmra.mrb[0].mxu0 %v416
          %v495 = vpop.f32.mrb[0].mxu0
          %v496 = vadd.f32 0.0, %v495
          %v497 = vpop.f32.mrb[0].mxu0
          %498 = vmatprep.mubr.f32.mxu0 0.0
          %499 = vmatmul.mubr.f32.gmra.mrb[0].mxu0 %v419
          %v500 = vpop.f32.mrb[0].mxu0
          %v501 = vadd.f32 0.0, %v500
          %v502 = vpop.f32.mrb[0].mxu0
          %503 = vmatprep.mubr.f32.mxu0 0.0
          %504 = vmatmul.mubr.f32.gmra.mrb[0].mxu0 %v422
          %v505 = vpop.f32.mrb[0].mxu0
          %v506 = vadd.f32 0.0, %v505
          %v507 = vpop.f32.mrb[0].mxu0
          %508 = vdwg.mxu0
          %s509 = scalar_lea.vmem [#allocation5], %s322
          %v510 = vld [vmem:[%s509] sm:$0xff]
          %v511 = vld [vmem:[%s509 + $0x8] sm:$0xff]
          %v512 = vld [vmem:[%s509 + $0x10] sm:$0xff]
          %v513 = vld [vmem:[%s509 + $0x18] sm:$0xff]
          %515 = vset.pattern.permute.xlu0 0
          %516 = vperm.xlu0 %515, %v510
          %v517 = vpop.permute.xlu0 %516
          %520 = vset.pattern.permute.xlu0 0
          %521 = vperm.xlu0 %520, %v511
          %v522 = vpop.permute.xlu0 %521
          %525 = vset.pattern.permute.xlu0 0
          %526 = vperm.xlu0 %525, %v512
          %v527 = vpop.permute.xlu0 %526
          %530 = vset.pattern.permute.xlu0 0
          %531 = vperm.xlu0 %530, %v513
          %v532 = vpop.permute.xlu0 %531
          %v534 = vmul.f32 %v491, %v517
          %v535 = vmul.f32 %v496, %v522
          %v536 = vmul.f32 %v501, %v527
          %v537 = vmul.f32 %v506, %v532
          %s538 = scalar_lea.vmem [#allocation3], %s322
          %vm539 = vcmask 130048
          %540 = vst.msk [vmem:[%s538] sm:$0xff] %vm539, %v534
          %541 = vst.msk [vmem:[%s538 + $0x8] sm:$0xff] %vm539, %v535
          %542 = vst.msk [vmem:[%s538 + $0x10] sm:$0xff] %vm539, %v536
          %543 = vst.msk [vmem:[%s538 + $0x18] sm:$0xff] %vm539, %v537
          %s544 = scalar_lea.vmem [#allocation4], %s322
          %v545 = vld [vmem:[%s544] sm:$0xff]
          %v546 = vld [vmem:[%s544 + $0x8] sm:$0xff]
          %v547 = vld [vmem:[%s544 + $0x10] sm:$0xff]
          %v548 = vld [vmem:[%s544 + $0x18] sm:$0xff]
          %v549 = vadd.f32 %v545, %v534
          %v550 = vadd.f32 %v546, %v535
          %v551 = vadd.f32 %v547, %v536
          %v552 = vadd.f32 %v548, %v537
          %553 = vst.msk [vmem:[%s544] sm:$0xff] %vm539, %v549
          %554 = vst.msk [vmem:[%s544 + $0x8] sm:$0xff] %vm539, %v550
          %555 = vst.msk [vmem:[%s544 + $0x10] sm:$0xff] %vm539, %v551
          %556 = vst.msk [vmem:[%s544 + $0x18] sm:$0xff] %vm539, %v552
        $region56: #{tpu_custom_call.1} parent=43 // pred_fallthru
          _
        %p557 = scmp.ne.s32.totalorder %s396, 1
        %p558 = pnand %p398, %p557
        %p559 = pneg %p558
        // Predicated region
        $region57: #{tpu_custom_call.1} parent=43 // pred_check
          _
        $region58: #{tpu_custom_call.1} parent=43 // pred_check_branch
          %561 = sbr.rel (%p558) target = $region60
        $region59: #{tpu_custom_call.1} parent=43 // pred_region
          %v562 = vld [vmem:[%s317] sm:$0xff]
          %v563 = vld [vmem:[%s317 + $0x8] sm:$0xff]
          %v564 = vld [vmem:[%s317 + $0x10] sm:$0xff]
          %v565 = vld [vmem:[%s317 + $0x18] sm:$0xff]
          %v566 = vld [vmem:[#allocation3] sm:$0xff]
          %v567 = vld [vmem:[#allocation3 + $0x8] sm:$0xff]
          %v568 = vld [vmem:[#allocation3 + $0x10] sm:$0xff]
          %v569 = vld [vmem:[#allocation3 + $0x18] sm:$0xff]
          %vm570 = vcmask 261120
          %v572 = vsel %vm570, %v562, 0
          %v575 = vsel %vm570, %v563, 0
          %v578 = vsel %vm570, %v564, 0
          %v581 = vsel %vm570, %v565, 0
          %583 = vmatprep.subr.mxu0 0.0
          %584 = vmatpush1.msra.mxu0 %v566
          %585 = vmatprep.subr.mxu0 0.0
          %586 = vmatpush1.msra.mxu0 %v567
          %587 = vmatprep.subr.mxu0 0.0
          %588 = vmatpush1.msra.mxu0 %v568
          %589 = vmatprep.subr.mxu0 0.0
          %590 = vmatpush1.msra.mxu0 %v569
          %591 = vmatprep.subr.mxu0 0.0
          %592 = vmatpush1.msra.mxu0 0.0
          %593 = vmatprep.subr.mxu0 0.0
          %594 = vmatpush1.msra.mxu0 0.0
          %595 = vmatprep.subr.mxu0 0.0
          %596 = vmatpush1.msra.mxu0 0.0
          %597 = vmatprep.subr.mxu0 0.0
          %598 = vmatpush1.msra.mxu0 0.0
          %599 = vmatprep.subr.mxu0 0.0
          %600 = vmatpush1.msra.mxu0 0.0
          %601 = vmatprep.subr.mxu0 0.0
          %602 = vmatpush1.msra.mxu0 0.0
          %603 = vmatprep.subr.mxu0 0.0
          %604 = vmatpush1.msra.mxu0 0.0
          %605 = vmatprep.subr.mxu0 0.0
          %606 = vmatpush1.msra.mxu0 0.0
          %607 = vmatprep.subr.mxu0 0.0
          %608 = vmatpush1.msra.mxu0 0.0
          %609 = vmatprep.subr.mxu0 0.0
          %610 = vmatpush1.msra.mxu0 0.0
          %611 = vmatprep.subr.mxu0 0.0
          %612 = vmatpush1.msra.mxu0 0.0
          %613 = vmatprep.subr.mxu0 0.0
          %614 = vmatpush1.msra.mxu0 0.0
          %615 = vmatprep.subr.mxu0 0.0
          %616 = vmatpush1.msra.mxu0 0.0
          %617 = vmatprep.subr.mxu0 0.0
          %618 = vmatpush1.msra.mxu0 0.0
          %619 = vmatprep.subr.mxu0 0.0
          %620 = vmatpush1.msra.mxu0 0.0
          %621 = vmatprep.subr.mxu0 0.0
          %622 = vmatpush1.msra.mxu0 0.0
          %623 = vmatprep.subr.mxu0 0.0
          %624 = vmatpush1.msra.mxu0 0.0
          %625 = vmatprep.subr.mxu0 0.0
          %626 = vmatpush1.msra.mxu0 0.0
          %627 = vmatprep.subr.mxu0 0.0
          %628 = vmatpush1.msra.mxu0 0.0
          %629 = vmatprep.subr.mxu0 0.0
          %630 = vmatpush1.msra.mxu0 0.0
          %631 = vmatprep.subr.mxu0 0.0
          %632 = vmatpush1.msra.mxu0 0.0
          %633 = vmatprep.subr.mxu0 0.0
          %634 = vmatpush1.msra.mxu0 0.0
          %635 = vmatprep.subr.mxu0 0.0
          %636 = vmatpush1.msra.mxu0 0.0
          %637 = vmatprep.subr.mxu0 0.0
          %638 = vmatpush1.msra.mxu0 0.0
          %639 = vmatprep.subr.mxu0 0.0
          %640 = vmatpush1.msra.mxu0 0.0
          %641 = vmatprep.subr.mxu0 0.0
          %642 = vmatpush1.msra.mxu0 0.0
          %643 = vmatprep.subr.mxu0 0.0
          %644 = vmatpush1.msra.mxu0 0.0
          %645 = vmatprep.subr.mxu0 0.0
          %646 = vmatpush1.msra.mxu0 0.0
          %647 = vmatprep.mubr.f32.mxu0 0.0
          %648 = vmatmul.mubr.f32.gmra.mrb[0].mxu0 %v572
          %v649 = vpop.f32.mrb[0].mxu0
          %v650 = vadd.f32 0.0, %v649
          %v651 = vpop.f32.mrb[0].mxu0
          %652 = vmatprep.mubr.f32.mxu0 0.0
          %653 = vmatmul.mubr.f32.gmra.mrb[0].mxu0 %v575
          %v654 = vpop.f32.mrb[0].mxu0
          %v655 = vadd.f32 0.0, %v654
          %v656 = vpop.f32.mrb[0].mxu0
          %657 = vmatprep.mubr.f32.mxu0 0.0
          %658 = vmatmul.mubr.f32.gmra.mrb[0].mxu0 %v578
          %v659 = vpop.f32.mrb[0].mxu0
          %v660 = vadd.f32 0.0, %v659
          %v661 = vpop.f32.mrb[0].mxu0
          %662 = vmatprep.mubr.f32.mxu0 0.0
          %663 = vmatmul.mubr.f32.gmra.mrb[0].mxu0 %v581
          %v664 = vpop.f32.mrb[0].mxu0
          %v665 = vadd.f32 0.0, %v664
          %v666 = vpop.f32.mrb[0].mxu0
          %667 = vdwg.mxu0
          %s668 = scalar_lea.vmem [#allocation5], %s322
          %v669 = vld [vmem:[%s668] sm:$0xff]
          %v670 = vld [vmem:[%s668 + $0x8] sm:$0xff]
          %v671 = vld [vmem:[%s668 + $0x10] sm:$0xff]
          %v672 = vld [vmem:[%s668 + $0x18] sm:$0xff]
          %674 = vset.pattern.permute.xlu0 0
          %675 = vperm.xlu0 %674, %v669
          %v676 = vpop.permute.xlu0 %675
          %679 = vset.pattern.permute.xlu0 0
          %680 = vperm.xlu0 %679, %v670
          %v681 = vpop.permute.xlu0 %680
          %684 = vset.pattern.permute.xlu0 0
          %685 = vperm.xlu0 %684, %v671
          %v686 = vpop.permute.xlu0 %685
          %689 = vset.pattern.permute.xlu0 0
          %690 = vperm.xlu0 %689, %v672
          %v691 = vpop.permute.xlu0 %690
          %v693 = vmul.f32 %v650, %v676
          %v694 = vmul.f32 %v655, %v681
          %v695 = vmul.f32 %v660, %v686
          %v696 = vmul.f32 %v665, %v691
          %s697 = scalar_lea.vmem [#allocation2], %s322
          %vm698 = vcmask 130048
          %699 = vst.msk [vmem:[%s697] sm:$0xff] %vm698, %v693
          %700 = vst.msk [vmem:[%s697 + $0x8] sm:$0xff] %vm698, %v694
          %701 = vst.msk [vmem:[%s697 + $0x10] sm:$0xff] %vm698, %v695
          %702 = vst.msk [vmem:[%s697 + $0x18] sm:$0xff] %vm698, %v696
          %s703 = scalar_lea.vmem [#allocation4], %s322
          %v704 = vld [vmem:[%s703] sm:$0xff]
          %v705 = vld [vmem:[%s703 + $0x8] sm:$0xff]
          %v706 = vld [vmem:[%s703 + $0x10] sm:$0xff]
          %v707 = vld [vmem:[%s703 + $0x18] sm:$0xff]
          %v708 = vadd.f32 %v704, %v693
          %v709 = vadd.f32 %v705, %v694
          %v710 = vadd.f32 %v706, %v695
          %v711 = vadd.f32 %v707, %v696
          %712 = vst.msk [vmem:[%s703] sm:$0xff] %vm698, %v708
          %713 = vst.msk [vmem:[%s703 + $0x8] sm:$0xff] %vm698, %v709
          %714 = vst.msk [vmem:[%s703 + $0x10] sm:$0xff] %vm698, %v710
          %715 = vst.msk [vmem:[%s703 + $0x18] sm:$0xff] %vm698, %v711
        $region60: #{tpu_custom_call.1} parent=43 // pred_fallthru
          _
        %p716 = scmp.eq.s32.totalorder %s25, 8
        // Predicated region
        $region61: #{tpu_custom_call.1} parent=43 // pred_check
          %p717 = pneg %p716
        $region62: #{tpu_custom_call.1} parent=43 // pred_check_branch
          %719 = sbr.rel (%p717) target = $region64
        $region63: #{tpu_custom_call.1} parent=43 // pred_region
          %s720 = scalar_lea.vmem [#allocation5], %s322
          %v721 = vld [vmem:[%s720] sm:$0xff]
          %v722 = vld [vmem:[%s720 + $0x8] sm:$0xff]
          %v723 = vld [vmem:[%s720 + $0x10] sm:$0xff]
          %v724 = vld [vmem:[%s720 + $0x18] sm:$0xff]
          %v725 = vrsqrt.pop %v721
          %v726 = vrsqrt.pop %v722
          %v727 = vrsqrt.pop %v723
          %v728 = vrsqrt.pop %v724
          %s729 = scalar_lea.vmem [#allocation4], %s322
          %v730 = vld [vmem:[%s729] sm:$0xff]
          %v731 = vld [vmem:[%s729 + $0x8] sm:$0xff]
          %v732 = vld [vmem:[%s729 + $0x10] sm:$0xff]
          %v733 = vld [vmem:[%s729 + $0x18] sm:$0xff]
          %v734 = vmul.f32 %v725, 0.055555556
          %v735 = vmul.f32 %v726, 0.055555556
          %v736 = vmul.f32 %v727, 0.055555556
          %v737 = vmul.f32 %v728, 0.055555556
          %739 = vset.pattern.permute.xlu0 0
          %740 = vperm.xlu0 %739, %v734
          %v741 = vpop.permute.xlu0 %740
          %744 = vset.pattern.permute.xlu0 0
          %745 = vperm.xlu0 %744, %v735
          %v746 = vpop.permute.xlu0 %745
          %749 = vset.pattern.permute.xlu0 0
          %750 = vperm.xlu0 %749, %v736
          %v751 = vpop.permute.xlu0 %750
          %754 = vset.pattern.permute.xlu0 0
          %755 = vperm.xlu0 %754, %v737
          %v756 = vpop.permute.xlu0 %755
          %v758 = vmul.f32 %v730, %v741
          %v759 = vmul.f32 %v731, %v746
          %v760 = vmul.f32 %v732, %v751
          %v761 = vmul.f32 %v733, %v756
          %v762 = vld [vmem:[%s2] sm:$0xff]
          %v763 = vld [vmem:[%s2 + $0x8] sm:$0xff]
          %v764 = vld [vmem:[%s3] sm:$0x1]
          %v766 = vlaneseq
          %v767 = vshrl.u32 %v766, 7
          %v768 = vsub.s32 0, %v767
          %v769 = vrot.slane %v764, %v768
          %vm771 = vcmask 130048
          %v773 = vsel %vm771, %v758, 0
          %v776 = vsel %vm771, %v759, 0
          %v779 = vsel %vm771, %v760, 0
          %v782 = vsel %vm771, %v761, 0
          %784 = vmatprep.subr.mxu0 0.0
          %785 = vmatpush1.msra.mxu0 %v762
          %786 = vmatprep.subr.mxu0 0.0
          %787 = vmatpush1.msra.mxu0 %v763
          %788 = vmatprep.subr.mxu0 0.0
          %789 = vmatpush1.msra.mxu0 0.0
          %790 = vmatprep.subr.mxu0 0.0
          %791 = vmatpush1.msra.mxu0 0.0
          %792 = vmatprep.subr.mxu0 0.0
          %793 = vmatpush1.msra.mxu0 0.0
          %794 = vmatprep.subr.mxu0 0.0
          %795 = vmatpush1.msra.mxu0 0.0
          %796 = vmatprep.subr.mxu0 0.0
          %797 = vmatpush1.msra.mxu0 0.0
          %798 = vmatprep.subr.mxu0 0.0
          %799 = vmatpush1.msra.mxu0 0.0
          %800 = vmatprep.subr.mxu0 0.0
          %801 = vmatpush1.msra.mxu0 0.0
          %802 = vmatprep.subr.mxu0 0.0
          %803 = vmatpush1.msra.mxu0 0.0
          %804 = vmatprep.subr.mxu0 0.0
          %805 = vmatpush1.msra.mxu0 0.0
          %806 = vmatprep.subr.mxu0 0.0
          %807 = vmatpush1.msra.mxu0 0.0
          %808 = vmatprep.subr.mxu0 0.0
          %809 = vmatpush1.msra.mxu0 0.0
          %810 = vmatprep.subr.mxu0 0.0
          %811 = vmatpush1.msra.mxu0 0.0
          %812 = vmatprep.subr.mxu0 0.0
          %813 = vmatpush1.msra.mxu0 0.0
          %814 = vmatprep.subr.mxu0 0.0
          %815 = vmatpush1.msra.mxu0 0.0
          %816 = vmatprep.subr.mxu0 0.0
          %817 = vmatpush1.msra.mxu0 0.0
          %818 = vmatprep.subr.mxu0 0.0
          %819 = vmatpush1.msra.mxu0 0.0
          %820 = vmatprep.subr.mxu0 0.0
          %821 = vmatpush1.msra.mxu0 0.0
          %822 = vmatprep.subr.mxu0 0.0
          %823 = vmatpush1.msra.mxu0 0.0
          %824 = vmatprep.subr.mxu0 0.0
          %825 = vmatpush1.msra.mxu0 0.0
          %826 = vmatprep.subr.mxu0 0.0
          %827 = vmatpush1.msra.mxu0 0.0
          %828 = vmatprep.subr.mxu0 0.0
          %829 = vmatpush1.msra.mxu0 0.0
          %830 = vmatprep.subr.mxu0 0.0
          %831 = vmatpush1.msra.mxu0 0.0
          %832 = vmatprep.subr.mxu0 0.0
          %833 = vmatpush1.msra.mxu0 0.0
          %834 = vmatprep.subr.mxu0 0.0
          %835 = vmatpush1.msra.mxu0 0.0
          %836 = vmatprep.subr.mxu0 0.0
          %837 = vmatpush1.msra.mxu0 0.0
          %838 = vmatprep.subr.mxu0 0.0
          %839 = vmatpush1.msra.mxu0 0.0
          %840 = vmatprep.subr.mxu0 0.0
          %841 = vmatpush1.msra.mxu0 0.0
          %842 = vmatprep.subr.mxu0 0.0
          %843 = vmatpush1.msra.mxu0 0.0
          %844 = vmatprep.subr.mxu0 0.0
          %845 = vmatpush1.msra.mxu0 0.0
          %846 = vmatprep.subr.mxu0 0.0
          %847 = vmatpush1.msra.mxu0 0.0
          %848 = vmatprep.mubr.f32.mxu0 0.0
          %849 = vmatmul.mubr.f32.gmra.mrb[0].mxu0 %v773
          %v850 = vpop.f32.mrb[0].mxu0
          %v851 = vadd.f32 %v769, %v850
          %v852 = vpop.f32.mrb[0].mxu0
          %853 = vmatprep.mubr.f32.mxu0 0.0
          %854 = vmatmul.mubr.f32.gmra.mrb[0].mxu0 %v776
          %v855 = vpop.f32.mrb[0].mxu0
          %v856 = vadd.f32 %v769, %v855
          %v857 = vpop.f32.mrb[0].mxu0
          %858 = vmatprep.mubr.f32.mxu0 0.0
          %859 = vmatmul.mubr.f32.gmra.mrb[0].mxu0 %v779
          %v860 = vpop.f32.mrb[0].mxu0
          %v861 = vadd.f32 %v769, %v860
          %v862 = vpop.f32.mrb[0].mxu0
          %863 = vmatprep.mubr.f32.mxu0 0.0
          %864 = vmatmul.mubr.f32.gmra.mrb[0].mxu0 %v782
          %v865 = vpop.f32.mrb[0].mxu0
          %v866 = vadd.f32 %v769, %v865
          %v867 = vpop.f32.mrb[0].mxu0
          %868 = vdwg.mxu0
          %v869 = vmax.f32 %v851, 0.0
          %v870 = vmax.f32 %v856, 0.0
          %v871 = vmax.f32 %v861, 0.0
          %v872 = vmax.f32 %v866, 0.0
          %v873 = vld [vmem:[#allocation6] sm:$0xff]
          %v874 = vld [vmem:[#allocation6 + $0x8] sm:$0xff]
          %v875 = vld [vmem:[#allocation6 + $0x10] sm:$0xff]
          %v876 = vld [vmem:[#allocation6 + $0x18] sm:$0xff]
          %v877 = vld [vmem:[%s5] sm:$0x1]
          %v879 = vlaneseq
          %v880 = vshrl.u32 %v879, 7
          %v881 = vsub.s32 0, %v880
          %v882 = vrot.slane %v877, %v881
          %vm884 = vcmask 261120
          %v886 = vsel %vm884, %v869, 0
          %v889 = vsel %vm884, %v870, 0
          %v892 = vsel %vm884, %v871, 0
          %v895 = vsel %vm884, %v872, 0
          %897 = vmatprep.subr.mxu0 0.0
          %898 = vmatpush1.msra.mxu0 %v873
          %899 = vmatprep.subr.mxu0 0.0
          %900 = vmatpush1.msra.mxu0 %v874
          %901 = vmatprep.subr.mxu0 0.0
          %902 = vmatpush1.msra.mxu0 %v875
          %903 = vmatprep.subr.mxu0 0.0
          %904 = vmatpush1.msra.mxu0 %v876
          %905 = vmatprep.subr.mxu0 0.0
          %906 = vmatpush1.msra.mxu0 0.0
          %907 = vmatprep.subr.mxu0 0.0
          %908 = vmatpush1.msra.mxu0 0.0
          %909 = vmatprep.subr.mxu0 0.0
          %910 = vmatpush1.msra.mxu0 0.0
          %911 = vmatprep.subr.mxu0 0.0
          %912 = vmatpush1.msra.mxu0 0.0
          %913 = vmatprep.subr.mxu0 0.0
          %914 = vmatpush1.msra.mxu0 0.0
          %915 = vmatprep.subr.mxu0 0.0
          %916 = vmatpush1.msra.mxu0 0.0
          %917 = vmatprep.subr.mxu0 0.0
          %918 = vmatpush1.msra.mxu0 0.0
          %919 = vmatprep.subr.mxu0 0.0
          %920 = vmatpush1.msra.mxu0 0.0
          %921 = vmatprep.subr.mxu0 0.0
          %922 = vmatpush1.msra.mxu0 0.0
          %923 = vmatprep.subr.mxu0 0.0
          %924 = vmatpush1.msra.mxu0 0.0
          %925 = vmatprep.subr.mxu0 0.0
          %926 = vmatpush1.msra.mxu0 0.0
          %927 = vmatprep.subr.mxu0 0.0
          %928 = vmatpush1.msra.mxu0 0.0
          %929 = vmatprep.subr.mxu0 0.0
          %930 = vmatpush1.msra.mxu0 0.0
          %931 = vmatprep.subr.mxu0 0.0
          %932 = vmatpush1.msra.mxu0 0.0
          %933 = vmatprep.subr.mxu0 0.0
          %934 = vmatpush1.msra.mxu0 0.0
          %935 = vmatprep.subr.mxu0 0.0
          %936 = vmatpush1.msra.mxu0 0.0
          %937 = vmatprep.subr.mxu0 0.0
          %938 = vmatpush1.msra.mxu0 0.0
          %939 = vmatprep.subr.mxu0 0.0
          %940 = vmatpush1.msra.mxu0 0.0
          %941 = vmatprep.subr.mxu0 0.0
          %942 = vmatpush1.msra.mxu0 0.0
          %943 = vmatprep.subr.mxu0 0.0
          %944 = vmatpush1.msra.mxu0 0.0
          %945 = vmatprep.subr.mxu0 0.0
          %946 = vmatpush1.msra.mxu0 0.0
          %947 = vmatprep.subr.mxu0 0.0
          %948 = vmatpush1.msra.mxu0 0.0
          %949 = vmatprep.subr.mxu0 0.0
          %950 = vmatpush1.msra.mxu0 0.0
          %951 = vmatprep.subr.mxu0 0.0
          %952 = vmatpush1.msra.mxu0 0.0
          %953 = vmatprep.subr.mxu0 0.0
          %954 = vmatpush1.msra.mxu0 0.0
          %955 = vmatprep.subr.mxu0 0.0
          %956 = vmatpush1.msra.mxu0 0.0
          %957 = vmatprep.subr.mxu0 0.0
          %958 = vmatpush1.msra.mxu0 0.0
          %959 = vmatprep.subr.mxu0 0.0
          %960 = vmatpush1.msra.mxu0 0.0
          %961 = vmatprep.mubr.f32.mxu0 0.0
          %962 = vmatmul.mubr.f32.gmra.mrb[0].mxu0 %v886
          %v963 = vpop.f32.mrb[0].mxu0
          %v964 = vadd.f32 %v882, %v963
          %v965 = vpop.f32.mrb[0].mxu0
          %966 = vmatprep.mubr.f32.mxu0 0.0
          %967 = vmatmul.mubr.f32.gmra.mrb[0].mxu0 %v889
          %v968 = vpop.f32.mrb[0].mxu0
          %v969 = vadd.f32 %v882, %v968
          %v970 = vpop.f32.mrb[0].mxu0
          %971 = vmatprep.mubr.f32.mxu0 0.0
          %972 = vmatmul.mubr.f32.gmra.mrb[0].mxu0 %v892
          %v973 = vpop.f32.mrb[0].mxu0
          %v974 = vadd.f32 %v882, %v973
          %v975 = vpop.f32.mrb[0].mxu0
          %976 = vmatprep.mubr.f32.mxu0 0.0
          %977 = vmatmul.mubr.f32.gmra.mrb[0].mxu0 %v895
          %v978 = vpop.f32.mrb[0].mxu0
          %v979 = vadd.f32 %v882, %v978
          %v980 = vpop.f32.mrb[0].mxu0
          %981 = vdwg.mxu0
          %982 = vmax.xlane.f32.xlu0 %v964
          %v983 = vpop.xlane.xlu0 %982
          %984 = vmax.xlane.f32.xlu0 %v969
          %v985 = vpop.xlane.xlu0 %984
          %986 = vmax.xlane.f32.xlu0 %v974
          %v987 = vpop.xlane.xlu0 %986
          %988 = vmax.xlane.f32.xlu0 %v979
          %v989 = vpop.xlane.xlu0 %988
          %v990 = vsub.f32 %v964, %v983
          %v991 = vsub.f32 %v969, %v985
          %v992 = vsub.f32 %v974, %v987
          %v993 = vsub.f32 %v979, %v989
          %v994 = vmul.f32 %v990, 1.442695
          %v995 = vpow.pop %v994
          %v996 = vmul.f32 %v991, 1.442695
          %v997 = vpow.pop %v996
          %v998 = vmul.f32 %v992, 1.442695
          %v999 = vpow.pop %v998
          %v1000 = vmul.f32 %v993, 1.442695
          %v1001 = vpow.pop %v1000
          %1002 = vadd.xlane.f32.xlu0 %v995
          %v1003 = vpop.xlane.xlu0 %1002
          %1004 = vadd.xlane.f32.xlu0 %v997
          %v1005 = vpop.xlane.xlu0 %1004
          %1006 = vadd.xlane.f32.xlu0 %v999
          %v1007 = vpop.xlane.xlu0 %1006
          %1008 = vadd.xlane.f32.xlu0 %v1001
          %v1009 = vpop.xlane.xlu0 %1008
          %v1010 = vlog2.pop %v1003
          %v1011 = vmul.f32 %v1010, 0.6931472
          %v1012 = vlog2.pop %v1005
          %v1013 = vmul.f32 %v1012, 0.6931472
          %v1014 = vlog2.pop %v1007
          %v1015 = vmul.f32 %v1014, 0.6931472
          %v1016 = vlog2.pop %v1009
          %v1017 = vmul.f32 %v1016, 0.6931472
          %v1018 = vadd.f32 %v983, %v1011
          %v1019 = vadd.f32 %v985, %v1013
          %v1020 = vadd.f32 %v987, %v1015
          %v1021 = vadd.f32 %v989, %v1017
          %v1022 = vsub.f32 %v964, %v1018
          %v1023 = vsub.f32 %v969, %v1019
          %v1024 = vsub.f32 %v974, %v1020
          %v1025 = vsub.f32 %v979, %v1021
          %1026 = vst [vmem:[%s302] sm:$0xff] %v1022
          %1027 = vst [vmem:[%s302 + $0x8] sm:$0xff] %v1023
          %1028 = vst [vmem:[%s302 + $0x10] sm:$0xff] %v1024
          %1029 = vst [vmem:[%s302 + $0x18] sm:$0xff] %v1025
        $region64: #{tpu_custom_call.1} parent=43 // pred_fallthru
          _
        %s1030 = sand.u32 %s185, 1
        %s1031 = scalar_lea.sflag [#allocation8], %s1030
        %s1032 = sand.u32 %s185, 1
        %s1033 = smul.addr %s1032, 32
        %s1034 = scalar_lea.vmem [#allocation9], %s1033
        // Predicated region
        $region65: #{tpu_custom_call.1} parent=43 // pred_check
          %p1035 = pneg %p195
        $region66: #{tpu_custom_call.1} parent=43 // pred_check_branch
          %1037 = sbr.rel (%p1035) target = $region68
        $region67: #{tpu_custom_call.1} parent=43 // pred_region
          %p1038 = scmp.eq.s32.totalorder %s25, 8
          %s1039 = scalar_select %p1038, %s26, 0
          %s1040 = smul.u32 4, %s1039
          %s1042 = ssub.s32 512, 512
          %1043 = vsyncadd %s1031, %s1042
          %s1044 = smul.addr %s1040, 128
          %s1045 = scalar_lea.hbm %s6, %s1044
          %s1046 = sshll.u32 %s1034, 4
          %s1047 = int_to_ptr.vmem [resolvable:$true] %s1046
          %1052 = dma.vmem_to_hbm [thread:$0]  %s1047, 512, %s1045, %s1031, 128, 128, 8
        $region68: #{tpu_custom_call.1} parent=43 // pred_fallthru
          _
      $region44: #{tpu_custom_call.1} parent=5 // pred_fallthru
        _
      %p1053 = scmp.le.s32.totalorder 2, %s16
      // Predicated region
      $region69: #{tpu_custom_call.1} parent=5 // pred_check
        %p1054 = pneg %p1053
      $region70: #{tpu_custom_call.1} parent=5 // pred_check_branch
        %1056 = sbr.rel (%p1054) target = $region72
      $region71: #{tpu_custom_call.1} parent=5 // pred_region
        %s1057 = ssub.s32 %s16, 2
        // Predicated region
        $region73: #{tpu_custom_call.1} parent=71 // pred_check
          %p1058 = pneg %p201
        $region74: #{tpu_custom_call.1} parent=71 // pred_check_branch
          %1060 = sbr.rel (%p1058) target = $region76
        $region75: #{tpu_custom_call.1} parent=71 // pred_region
          %s1061 = sand.u32 %s186, 1
          %s1062 = scalar_lea.sflag [#allocation8], %s1061
          %s1063 = sand.u32 %s186, 1
          %s1064 = smul.addr %s1063, 32
          %s1065 = scalar_lea.vmem [#allocation9], %s1064
          %1066 = dma.done %s1062, 512
        $region76: #{tpu_custom_call.1} parent=71 // pred_fallthru
          _
      $region72: #{tpu_custom_call.1} parent=5 // pred_fallthru
        _
    $region6: #{tpu_custom_call.1} parent=1 // loop_footer
      %s20 = sadd.s32 1, %s16
    $region7: #{tpu_custom_call.1} parent=1 // loop_footer_branch
      %15 = sbr.rel target = $region3
    $region8: #{tpu_custom_call.1} parent=1 // loop_exit
      _
    %1067 = vsyncpa [#allocation7], 1
    %s1068 = scalar_lea.sflag [#allocation7], 1
    %1069 = vsyncpa %s1068, 1
    %1070 = vsyncpa [#allocation8], 1
    %s1071 = scalar_lea.sflag [#allocation8], 1
    %1072 = vsyncpa %s1071, 1

</llo_original>
